<compile_context>
chip_gen: v7x
topology: tpu7x:2x2x1
jax: 0.10.0
libtpu: 0.0.40
codegen_flags: <defaults>
</compile_context>

<pallas_src>
import jax
import jax.numpy as jnp
from jax.experimental import pallas as pl
from jax.experimental.pallas import tpu as pltpu


def _round_up(x, m):
    return (x + m - 1) // m * m


_VMEM_CAP_CACHE = [None]


def _vmem_capacity_bytes():
    """Physical VMEM of the local TPU; conservative 64 MiB fallback (v7x-sized)."""
    if _VMEM_CAP_CACHE[0] is None:
        try:
            _VMEM_CAP_CACHE[0] = int(pltpu.get_tpu_info().vmem_capacity_bytes)
        except Exception:
            _VMEM_CAP_CACHE[0] = 64 * 1024 * 1024
    return _VMEM_CAP_CACHE[0]


# Per-point VMEM footprint of one grid step with this channel-last layout
# (every (tile, c) tensor lane-pads c -> 128 lanes in VMEM):
#   feat block (tile, C_in) f32 -> 512 B/pt, double-buffered  = 1024
#   out  block (tile, K)    f32 -> 512 B/pt, double-buffered  = 1024
#   in-body temps (x bf16, h f32, h bf16, o f32; lane-padded) ~ 1536
_VMEM_BYTES_PER_POINT = 3584


def _tile_plan(n):
    """Pick the point tile and scoped-VMEM limit from the chip's VMEM capacity.

    v5e/v6e (128 MiB VMEM): tile ~18K points (~1 MiB streamed HBM per step).
    v7x / fallback (64 MiB): tile ~9K points (~0.5 MiB per step) — the padded
    channel-last in/out blocks are what cap the tile; feat arrives (N, C_in) so a
    fully lane-dense channel-first HBM layout would itself cost an extra pass.
    """
    vmem_cap = _vmem_capacity_bytes()
    budget = vmem_cap // 2                       # leave half of VMEM as headroom
    tile_cap = max(512, (budget // _VMEM_BYTES_PER_POINT) // 512 * 512)
    tile = min(tile_cap, _round_up(n, 8))
    if tile > n:
        # Keep block_shape <= array shape: shrink to a multiple of 8 and let the
        # ragged tail land in a partial second block (no forced splitting
        # otherwise — single-TC v5e/v6e prefer one maximal tile for small N).
        tile = max(8, n - n % 8)
    grid_len = pl.cdiv(n, tile)
    vmem_limit = min(vmem_cap, budget + (16 << 20))
    return tile, grid_len, vmem_limit


def _backbone_mlp_kernel(x_ref, w1_ref, b1_ref, w2_ref, b2_ref, o_ref):
    """Fused per-point MLP: x (tile, Cin) f32 -> o (tile, K) f32."""
    x = x_ref[...].astype(jnp.bfloat16)              # cast fused into the kernel
    # MXU bf16 matmuls with f32 accumulation; bias + ReLU in f32 on the VPU.
    h = jnp.dot(x, w1_ref[...], preferred_element_type=jnp.float32)    # (tile, H)
    h = jnp.maximum(h + b1_ref[...], 0.0)
    o = jnp.dot(h.astype(jnp.bfloat16), w2_ref[...],
                preferred_element_type=jnp.float32)                    # (tile, K)
    o_ref[...] = (o + b2_ref[...]).astype(o_ref.dtype)


@jax.jit
def backbone_seg_logits(feat, w1, b1, w2, b2):
    """Fused MLP backbone over all points, tiled along the point axis.

    feat: (N, C_in) f32 (or bf16); w1 (C_in, H) bf16; b1 (1, H) f32;
    w2 (H, K) bf16; b2 (1, K) f32.  Returns seg_logits (N, K) f32.
    """
    n, c_in = feat.shape
    hidden = w1.shape[1]
    num_classes = w2.shape[1]
    tile, grid_len, vmem_limit = _tile_plan(n)

    return pl.pallas_call(
        _backbone_mlp_kernel,
        out_shape=jax.ShapeDtypeStruct((n, num_classes), jnp.float32),
        grid_spec=pl.GridSpec(
            grid=(grid_len,),
            in_specs=[
                pl.BlockSpec((tile, c_in), lambda i: (i, 0)),           # feat (streamed)
                pl.BlockSpec((c_in, hidden), lambda i: (0, 0)),         # W1 (resident)
                pl.BlockSpec((1, hidden), lambda i: (0, 0)),            # b1 (f32)
                pl.BlockSpec((hidden, num_classes), lambda i: (0, 0)),  # W2 (resident)
                pl.BlockSpec((1, num_classes), lambda i: (0, 0)),       # b2 (f32)
            ],
            out_specs=pl.BlockSpec((tile, num_classes), lambda i: (i, 0)),
        ),
        compiler_params=pltpu.CompilerParams(
            dimension_semantics=("parallel",),     # shards grid steps across TCs on v7x
            vmem_limit_bytes=vmem_limit,           # v5e scoped default (16 MiB) too low
        ),
    )(feat, w1, b1, w2, b2)


class DefaultSegmentorPallas:
    """JAX/Pallas counterpart of DefaultSegmentor (inference path)."""

    def __init__(self, in_channels, hidden_channels, num_classes, key):
        k1, k2, k3, k4 = jax.random.split(key, 4)
        # Deterministic synthetic parameters (Linear->ReLU->Linear backbone).
        # Weights in bf16 (native MXU path); biases in f32 (VPU math).
        self.w1 = (jax.random.normal(k1, (in_channels, hidden_channels), jnp.float32)
                   * (1.0 / jnp.sqrt(in_channels))).astype(jnp.bfloat16)
        self.b1 = jax.random.normal(k2, (1, hidden_channels), jnp.float32) * 0.01
        self.w2 = (jax.random.normal(k3, (hidden_channels, num_classes), jnp.float32)
                   * (1.0 / jnp.sqrt(hidden_channels))).astype(jnp.bfloat16)
        self.b2 = jax.random.normal(k4, (1, num_classes), jnp.float32) * 0.01
        # TODO(synk): criteria (loss) branches are train-only dead code in the given
        # forward (guarded by `if False`), so no loss is computed here.

    def forward(self, input_dict):
        seg_logits = backbone_seg_logits(
            input_dict["feat"], self.w1, self.b1, self.w2, self.b2
        )
        print("done")  # matches the reference forward's inference branch
        return dict(seg_logits=seg_logits)


def _reference_logits(feat, model):
    """Pure-JAX reference mirroring the kernel's bf16 quantization points."""
    feat_bf = feat.astype(jnp.bfloat16).astype(jnp.float32)
    w1_f = model.w1.astype(jnp.float32)
    w2_f = model.w2.astype(jnp.float32)
    ref_h = jnp.maximum(feat_bf @ w1_f + model.b1, 0.0)
    ref_h = ref_h.astype(jnp.bfloat16).astype(jnp.float32)
    return ref_h @ w2_f + model.b2


if __name__ == "__main__":
    key = jax.random.PRNGKey(0)
    k_feat, k_coord, k_params, k_big = jax.random.split(key, 4)

    # Small point-cloud style input_dict: 256 points, 6 input channels (xyz + rgb).
    N_POINTS, C_IN, HIDDEN, NUM_CLASSES = 256, 6, 32, 8
    feat = jax.random.normal(k_feat, (N_POINTS, C_IN), jnp.float32)
    coord = jax.random.normal(k_coord, (N_POINTS, 3), jnp.float32)
    input_dict = {"feat": feat, "coord": coord}

    model = DefaultSegmentorPallas(C_IN, HIDDEN, NUM_CLASSES, k_params)
    out = model.forward(input_dict)
    seg_logits = jax.block_until_ready(out["seg_logits"])

    ref = _reference_logits(feat, model)
    assert seg_logits.shape == (N_POINTS, NUM_CLASSES)
    assert seg_logits.dtype == jnp.float32
    assert jnp.allclose(seg_logits, ref, atol=5e-2, rtol=5e-2)

    # Second check: ragged N that exercises the multi-step grid and the masked
    # partial last block (no pad / slice anywhere in the wrapper).
    N_BIG = 20001
    feat_big = jax.random.normal(k_big, (N_BIG, C_IN), jnp.float32)
    logits_big = jax.block_until_ready(
        backbone_seg_logits(feat_big, model.w1, model.b1, model.w2, model.b2)
    )
    ref_big = _reference_logits(feat_big, model)
    assert logits_big.shape == (N_BIG, NUM_CLASSES)
    assert jnp.allclose(logits_big, ref_big, atol=5e-2, rtol=5e-2)

    print("KERNEL_OK")
</pallas_src>

<mosaic_0001>
module attributes {stable_mosaic.version = 11 : i64} {
  func.func @_backbone_mlp_kernel(%arg0: i32, %arg1: memref<256x6xf32, #tpu.memory_space<vmem>>, %arg2: memref<6x32xbf16, #tpu.memory_space<vmem>>, %arg3: memref<1x32xf32, #tpu.memory_space<vmem>>, %arg4: memref<32x8xbf16, #tpu.memory_space<vmem>>, %arg5: memref<1x8xf32, #tpu.memory_space<vmem>>, %arg6: memref<256x8xf32, #tpu.memory_space<vmem>>) attributes {dimension_semantics = [#tpu.dimension_semantics<parallel>], iteration_bounds = array<i64: 1>, scalar_prefetch = 0 : i64, scratch_operands = 0 : i64, tpu.core_type = #tpu.core_type<tc>, window_params = [{transform_indices = @transform_0, window_bounds = array<i64: 256, 6>}, {pipeline_mode = #tpu.pipeline_mode<synchronous>, transform_indices = @transform_1, window_bounds = array<i64: 6, 32>}, {pipeline_mode = #tpu.pipeline_mode<synchronous>, transform_indices = @transform_2, window_bounds = array<i64: 1, 32>}, {pipeline_mode = #tpu.pipeline_mode<synchronous>, transform_indices = @transform_3, window_bounds = array<i64: 32, 8>}, {pipeline_mode = #tpu.pipeline_mode<synchronous>, transform_indices = @transform_4, window_bounds = array<i64: 1, 8>}, {transform_indices = @transform_5, window_bounds = array<i64: 256, 8>}]} {
    %c0 = arith.constant 0 : index
    %c0_0 = arith.constant 0 : index
    %0 = vector.load %arg1[%c0, %c0_0] : memref<256x6xf32, #tpu.memory_space<vmem>>, vector<256x6xf32>
    %1 = arith.truncf %0 : vector<256x6xf32> to vector<256x6xbf16>
    %c0_1 = arith.constant 0 : index
    %c0_2 = arith.constant 0 : index
    %2 = vector.load %arg2[%c0_1, %c0_2] : memref<6x32xbf16, #tpu.memory_space<vmem>>, vector<6x32xbf16>
    %cst = arith.constant dense<0.000000e+00> : vector<256x32xf32>
    %3 = tpu.matmul %1, %2, %cst {dimension_numbers = #tpu.dot_dimension_numbers<[1], [0], [0], [1], [0, 0, 1, 1], [], []>} : vector<256x6xbf16>, vector<6x32xbf16>, vector<256x32xf32> -> vector<256x32xf32>
    %c0_3 = arith.constant 0 : index
    %c0_4 = arith.constant 0 : index
    %4 = vector.load %arg3[%c0_3, %c0_4] : memref<1x32xf32, #tpu.memory_space<vmem>>, vector<1x32xf32>
    %5 = vector.broadcast %4 : vector<1x32xf32> to vector<256x32xf32>
    %6 = arith.addf %3, %5 : vector<256x32xf32>
    %cst_5 = arith.constant 0.000000e+00 : f32
    %7 = vector.broadcast %cst_5 : f32 to vector<256x32xf32>
    %8 = arith.maximumf %6, %7 : vector<256x32xf32>
    %9 = arith.truncf %8 : vector<256x32xf32> to vector<256x32xbf16>
    %c0_6 = arith.constant 0 : index
    %c0_7 = arith.constant 0 : index
    %10 = vector.load %arg4[%c0_6, %c0_7] : memref<32x8xbf16, #tpu.memory_space<vmem>>, vector<32x8xbf16>
    %cst_8 = arith.constant dense<0.000000e+00> : vector<256x8xf32>
    %11 = tpu.matmul %9, %10, %cst_8 {dimension_numbers = #tpu.dot_dimension_numbers<[1], [0], [0], [1], [0, 0, 1, 1], [], []>} : vector<256x32xbf16>, vector<32x8xbf16>, vector<256x8xf32> -> vector<256x8xf32>
    %c0_9 = arith.constant 0 : index
    %c0_10 = arith.constant 0 : index
    %12 = vector.load %arg5[%c0_9, %c0_10] : memref<1x8xf32, #tpu.memory_space<vmem>>, vector<1x8xf32>
    %13 = vector.broadcast %12 : vector<1x8xf32> to vector<256x8xf32>
    %14 = arith.addf %11, %13 : vector<256x8xf32>
    %c0_11 = arith.constant 0 : index
    %c0_12 = arith.constant 0 : index
    %15 = vector.load %arg6[%c0_11, %c0_12] : memref<256x8xf32, #tpu.memory_space<vmem>>, vector<256x8xf32>
    tpu.vector_store %arg6[%c0_11, %c0_12], %14 {strides = array<i32>} : memref<256x8xf32, #tpu.memory_space<vmem>>, vector<256x8xf32>,
    return
  }
  func.func @transform_0(%arg0: i32) -> (i32, i32) {
    %c0_i32 = arith.constant 0 : i32
    %c0_i32_0 = arith.constant 0 : i32
    return %arg0, %c0_i32 : i32, i32
  }
  func.func @transform_1(%arg0: i32) -> (i32, i32) {
    %c0_i32 = arith.constant 0 : i32
    %c0_i32_0 = arith.constant 0 : i32
    %c0_i32_1 = arith.constant 0 : i32
    return %c0_i32, %c0_i32_0 : i32, i32
  }
  func.func @transform_2(%arg0: i32) -> (i32, i32) {
    %c0_i32 = arith.constant 0 : i32
    %c0_i32_0 = arith.constant 0 : i32
    %c0_i32_1 = arith.constant 0 : i32
    return %c0_i32, %c0_i32_0 : i32, i32
  }
  func.func @transform_3(%arg0: i32) -> (i32, i32) {
    %c0_i32 = arith.constant 0 : i32
    %c0_i32_0 = arith.constant 0 : i32
    %c0_i32_1 = arith.constant 0 : i32
    return %c0_i32, %c0_i32_0 : i32, i32
  }
  func.func @transform_4(%arg0: i32) -> (i32, i32) {
    %c0_i32 = arith.constant 0 : i32
    %c0_i32_0 = arith.constant 0 : i32
    %c0_i32_1 = arith.constant 0 : i32
    return %c0_i32, %c0_i32_0 : i32, i32
  }
  func.func @transform_5(%arg0: i32) -> (i32, i32) {
    %c0_i32 = arith.constant 0 : i32
    %c0_i32_0 = arith.constant 0 : i32
    return %arg0, %c0_i32 : i32, i32
  }
}

</mosaic_0001>

<llo_original>
// kernel: backbone_seg_logits.1
$region0: #{backbone_seg_logits.1}
  #allocation0 [shape = 'u32[]', space=smem, size = 0x4, offset = 0x4, fixed_abs, tag = 'smem constant byte address 0x4 - core index']
  #allocation1 [shape = 'u32[144,128]{1,0:T(1,128)}', space=vmem, size = 0x12000, scoped, tag = 'internal scratch']
  %s0 = inlined_call_operand.vmem [shape: f32[256,6], index: 0, kind: input, shape index: {}]
  %s1 = inlined_call_operand.vmem [shape: bf16[6,32], index: 1, kind: input, shape index: {}]
  %s2 = inlined_call_operand.vmem [shape: f32[1,32], index: 2, kind: input, shape index: {}]
  %s3 = inlined_call_operand.vmem [shape: bf16[32,8], index: 3, kind: input, shape index: {}]
  %s4 = inlined_call_operand.vmem [shape: f32[1,8], index: 4, kind: input, shape index: {}]
  %s5 = inlined_call_operand.vmem [shape: f32[256,8], index: 5, kind: output, shape index: {}]
  %s6 = sld [smem:[#allocation0]]
  $region30: #{backbone_seg_logits.1} parent=0
    _
  %s8 = ssub.s32 1, %s6
  %s9 = scalar_select 0, %s8, %s6
  // Predicated region
  $region2: #{backbone_seg_logits.1} parent=0 // pred_check
    _
  $region3: #{backbone_seg_logits.1} parent=0 // pred_check_branch
    %11 = sbr.rel (0) target = $region5
  $region4: #{backbone_seg_logits.1} parent=0 // pred_region
    _
  $region5: #{backbone_seg_logits.1} parent=0 // pred_fallthru
    _
  // Predicated region
  $region6: #{backbone_seg_logits.1} parent=0 // pred_check
    _
  $region7: #{backbone_seg_logits.1} parent=0 // pred_check_branch
    %13 = sbr.rel (0) target = $region9
  $region8: #{backbone_seg_logits.1} parent=0 // pred_region
    _
  $region9: #{backbone_seg_logits.1} parent=0 // pred_fallthru
    _
  // Predicated region
  $region10: #{backbone_seg_logits.1} parent=0 // pred_check
    _
  $region11: #{backbone_seg_logits.1} parent=0 // pred_check_branch
    %15 = sbr.rel (0) target = $region13
  $region12: #{backbone_seg_logits.1} parent=0 // pred_region
    _
  $region13: #{backbone_seg_logits.1} parent=0 // pred_fallthru
    _
  // Predicated region
  $region14: #{backbone_seg_logits.1} parent=0 // pred_check
    _
  $region15: #{backbone_seg_logits.1} parent=0 // pred_check_branch
    %17 = sbr.rel (0) target = $region17
  $region16: #{backbone_seg_logits.1} parent=0 // pred_region
    _
  $region17: #{backbone_seg_logits.1} parent=0 // pred_fallthru
    _
  // Predicated region
  $region18: #{backbone_seg_logits.1} parent=0 // pred_check
    _
  $region19: #{backbone_seg_logits.1} parent=0 // pred_check_branch
    %19 = sbr.rel (0) target = $region21
  $region20: #{backbone_seg_logits.1} parent=0 // pred_region
    _
  $region21: #{backbone_seg_logits.1} parent=0 // pred_fallthru
    _
  %v21 = vld [vmem:[%s0] sm:$0xff]
  %v22 = vld [vmem:[%s0 + $0x8] sm:$0xff]
  %v23 = vld [vmem:[%s0 + $0x10] sm:$0xff]
  %v24 = vld [vmem:[%s0 + $0x18] sm:$0xff]
  %v25 = vld [vmem:[%s0 + $0x20] sm:$0xff]
  %v26 = vld [vmem:[%s0 + $0x28] sm:$0xff]
  %v27 = vld [vmem:[%s0 + $0x30] sm:$0xff]
  %v28 = vld [vmem:[%s0 + $0x38] sm:$0xff]
  %v29 = vld [vmem:[%s0 + $0x40] sm:$0xff]
  %v30 = vld [vmem:[%s0 + $0x48] sm:$0xff]
  %v31 = vld [vmem:[%s0 + $0x50] sm:$0xff]
  %v32 = vld [vmem:[%s0 + $0x58] sm:$0xff]
  %v33 = vld [vmem:[%s0 + $0x60] sm:$0xff]
  %v34 = vld [vmem:[%s0 + $0x68] sm:$0xff]
  %v35 = vld [vmem:[%s0 + $0x70] sm:$0xff]
  %v36 = vld [vmem:[%s0 + $0x78] sm:$0xff]
  %v37 = vld [vmem:[%s0 + $0x80] sm:$0xff]
  %v38 = vld [vmem:[%s0 + $0x88] sm:$0xff]
  %v39 = vld [vmem:[%s0 + $0x90] sm:$0xff]
  %v40 = vld [vmem:[%s0 + $0x98] sm:$0xff]
  %v41 = vld [vmem:[%s0 + $0xa0] sm:$0xff]
  %v42 = vld [vmem:[%s0 + $0xa8] sm:$0xff]
  %v43 = vld [vmem:[%s0 + $0xb0] sm:$0xff]
  %v44 = vld [vmem:[%s0 + $0xb8] sm:$0xff]
  %v45 = vld [vmem:[%s0 + $0xc0] sm:$0xff]
  %v46 = vld [vmem:[%s0 + $0xc8] sm:$0xff]
  %v47 = vld [vmem:[%s0 + $0xd0] sm:$0xff]
  %v48 = vld [vmem:[%s0 + $0xd8] sm:$0xff]
  %v49 = vld [vmem:[%s0 + $0xe0] sm:$0xff]
  %v50 = vld [vmem:[%s0 + $0xe8] sm:$0xff]
  %v51 = vld [vmem:[%s0 + $0xf0] sm:$0xff]
  %v52 = vld [vmem:[%s0 + $0xf8] sm:$0xff]
  %v53 = vpack.c.bf16 %v22, %v21
  %v54 = vpack.c.bf16 %v24, %v23
  %v55 = vpack.c.bf16 %v26, %v25
  %v56 = vpack.c.bf16 %v28, %v27
  %v57 = vpack.c.bf16 %v30, %v29
  %v58 = vpack.c.bf16 %v32, %v31
  %v59 = vpack.c.bf16 %v34, %v33
  %v60 = vpack.c.bf16 %v36, %v35
  %v61 = vpack.c.bf16 %v38, %v37
  %v62 = vpack.c.bf16 %v40, %v39
  %v63 = vpack.c.bf16 %v42, %v41
  %v64 = vpack.c.bf16 %v44, %v43
  %v65 = vpack.c.bf16 %v46, %v45
  %v66 = vpack.c.bf16 %v48, %v47
  %v67 = vpack.c.bf16 %v50, %v49
  %v68 = vpack.c.bf16 %v52, %v51
  %v69 = vld [vmem:[%s1] sm:$0x7]
  %v70 = vld [vmem:[%s2] sm:$0x1]
  %v72 = vlaneseq
  %v73 = vshrl.u32 %v72, 7
  %v74 = vsub.s32 0, %v73
  %v75 = vrot.slane %v70, %v74
  %vm77 = vcmask 48128
  %v79 = vsel %vm77, %v53, 0
  %v82 = vsel %vm77, %v54, 0
  %v85 = vsel %vm77, %v55, 0
  %v88 = vsel %vm77, %v56, 0
  %v91 = vsel %vm77, %v57, 0
  %v94 = vsel %vm77, %v58, 0
  %v97 = vsel %vm77, %v59, 0
  %v100 = vsel %vm77, %v60, 0
  %v103 = vsel %vm77, %v61, 0
  %v106 = vsel %vm77, %v62, 0
  %v109 = vsel %vm77, %v63, 0
  %v112 = vsel %vm77, %v64, 0
  %v115 = vsel %vm77, %v65, 0
  %v118 = vsel %vm77, %v66, 0
  %v121 = vsel %vm77, %v67, 0
  %v124 = vsel %vm77, %v68, 0
  %vm126 = vcmask 1042432
  %v128 = vsel %vm126, %v69, 0
  %130 = vmatprep.subr.bf16.mxu0 0
  %131 = vmatpush1.bf16.msra.mxu0 %v128
  %132 = vmatprep.subr.bf16.mxu0 0
  %133 = vmatpush1.bf16.msra.mxu0 0
  %134 = vmatprep.subr.bf16.mxu0 0
  %135 = vmatpush1.bf16.msra.mxu0 0
  %136 = vmatprep.subr.bf16.mxu0 0
  %137 = vmatpush1.bf16.msra.mxu0 0
  %138 = vmatprep.subr.bf16.mxu0 0
  %139 = vmatpush1.bf16.msra.mxu0 0
  %140 = vmatprep.subr.bf16.mxu0 0
  %141 = vmatpush1.bf16.msra.mxu0 0
  %142 = vmatprep.subr.bf16.mxu0 0
  %143 = vmatpush1.bf16.msra.mxu0 0
  %144 = vmatprep.subr.bf16.mxu0 0
  %145 = vmatpush1.bf16.msra.mxu0 0
  %146 = vmatprep.subr.bf16.mxu0 0
  %147 = vmatpush1.bf16.msra.mxu0 0
  %148 = vmatprep.subr.bf16.mxu0 0
  %149 = vmatpush1.bf16.msra.mxu0 0
  %150 = vmatprep.subr.bf16.mxu0 0
  %151 = vmatpush1.bf16.msra.mxu0 0
  %152 = vmatprep.subr.bf16.mxu0 0
  %153 = vmatpush1.bf16.msra.mxu0 0
  %154 = vmatprep.subr.bf16.mxu0 0
  %155 = vmatpush1.bf16.msra.mxu0 0
  %156 = vmatprep.subr.bf16.mxu0 0
  %157 = vmatpush1.bf16.msra.mxu0 0
  %158 = vmatprep.subr.bf16.mxu0 0
  %159 = vmatpush1.bf16.msra.mxu0 0
  %160 = vmatprep.subr.bf16.mxu0 0
  %161 = vmatpush1.bf16.msra.mxu0 0
  %162 = vmatprep.mubr.bf16.mxu0 0
  %163 = vmatmul.mubr.bf16.gmra.mrb[0].mxu0 %v79
  %v164 = vpop.f32.mrb[0].mxu0
  %v165 = vadd.f32 %v75, %v164
  %v166 = vpop.f32.mrb[0].mxu0
  %v167 = vpop.f32.mrb[0].mxu0
  %v168 = vadd.f32 %v75, %v167
  %v169 = vpop.f32.mrb[0].mxu0
  %170 = vmatprep.mubr.bf16.mxu0 0
  %171 = vmatmul.mubr.bf16.gmra.mrb[0].mxu0 %v82
  %v172 = vpop.f32.mrb[0].mxu0
  %v173 = vadd.f32 %v75, %v172
  %v174 = vpop.f32.mrb[0].mxu0
  %v175 = vpop.f32.mrb[0].mxu0
  %v176 = vadd.f32 %v75, %v175
  %v177 = vpop.f32.mrb[0].mxu0
  %178 = vmatprep.mubr.bf16.mxu0 0
  %179 = vmatmul.mubr.bf16.gmra.mrb[0].mxu0 %v85
  %v180 = vpop.f32.mrb[0].mxu0
  %v181 = vadd.f32 %v75, %v180
  %v182 = vpop.f32.mrb[0].mxu0
  %v183 = vpop.f32.mrb[0].mxu0
  %v184 = vadd.f32 %v75, %v183
  %v185 = vpop.f32.mrb[0].mxu0
  %186 = vmatprep.mubr.bf16.mxu0 0
  %187 = vmatmul.mubr.bf16.gmra.mrb[0].mxu0 %v88
  %v188 = vpop.f32.mrb[0].mxu0
  %v189 = vadd.f32 %v75, %v188
  %v190 = vpop.f32.mrb[0].mxu0
  %v191 = vpop.f32.mrb[0].mxu0
  %v192 = vadd.f32 %v75, %v191
  %v193 = vpop.f32.mrb[0].mxu0
  %194 = vmatprep.mubr.bf16.mxu0 0
  %195 = vmatmul.mubr.bf16.gmra.mrb[0].mxu0 %v91
  %v196 = vpop.f32.mrb[0].mxu0
  %v197 = vadd.f32 %v75, %v196
  %v198 = vpop.f32.mrb[0].mxu0
  %v199 = vpop.f32.mrb[0].mxu0
  %v200 = vadd.f32 %v75, %v199
  %v201 = vpop.f32.mrb[0].mxu0
  %202 = vmatprep.mubr.bf16.mxu0 0
  %203 = vmatmul.mubr.bf16.gmra.mrb[0].mxu0 %v94
  %v204 = vpop.f32.mrb[0].mxu0
  %v205 = vadd.f32 %v75, %v204
  %v206 = vpop.f32.mrb[0].mxu0
  %v207 = vpop.f32.mrb[0].mxu0
  %v208 = vadd.f32 %v75, %v207
  %v209 = vpop.f32.mrb[0].mxu0
  %210 = vmatprep.mubr.bf16.mxu0 0
  %211 = vmatmul.mubr.bf16.gmra.mrb[0].mxu0 %v97
  %v212 = vpop.f32.mrb[0].mxu0
  %v213 = vadd.f32 %v75, %v212
  %v214 = vpop.f32.mrb[0].mxu0
  %v215 = vpop.f32.mrb[0].mxu0
  %v216 = vadd.f32 %v75, %v215
  %v217 = vpop.f32.mrb[0].mxu0
  %218 = vmatprep.mubr.bf16.mxu0 0
  %219 = vmatmul.mubr.bf16.gmra.mrb[0].mxu0 %v100
  %v220 = vpop.f32.mrb[0].mxu0
  %v221 = vadd.f32 %v75, %v220
  %v222 = vpop.f32.mrb[0].mxu0
  %v223 = vpop.f32.mrb[0].mxu0
  %v224 = vadd.f32 %v75, %v223
  %v225 = vpop.f32.mrb[0].mxu0
  %226 = vmatprep.mubr.bf16.mxu0 0
  %227 = vmatmul.mubr.bf16.gmra.mrb[0].mxu0 %v103
  %v228 = vpop.f32.mrb[0].mxu0
  %v229 = vadd.f32 %v75, %v228
  %v230 = vpop.f32.mrb[0].mxu0
  %v231 = vpop.f32.mrb[0].mxu0
  %v232 = vadd.f32 %v75, %v231
  %v233 = vpop.f32.mrb[0].mxu0
  %234 = vmatprep.mubr.bf16.mxu0 0
  %235 = vmatmul.mubr.bf16.gmra.mrb[0].mxu0 %v106
  %v236 = vpop.f32.mrb[0].mxu0
  %v237 = vadd.f32 %v75, %v236
  %v238 = vpop.f32.mrb[0].mxu0
  %v239 = vpop.f32.mrb[0].mxu0
  %v240 = vadd.f32 %v75, %v239
  %v241 = vpop.f32.mrb[0].mxu0
  %242 = vmatprep.mubr.bf16.mxu0 0
  %243 = vmatmul.mubr.bf16.gmra.mrb[0].mxu0 %v109
  %v244 = vpop.f32.mrb[0].mxu0
  %v245 = vadd.f32 %v75, %v244
  %v246 = vpop.f32.mrb[0].mxu0
  %v247 = vpop.f32.mrb[0].mxu0
  %v248 = vadd.f32 %v75, %v247
  %v249 = vpop.f32.mrb[0].mxu0
  %250 = vmatprep.mubr.bf16.mxu0 0
  %251 = vmatmul.mubr.bf16.gmra.mrb[0].mxu0 %v112
  %v252 = vpop.f32.mrb[0].mxu0
  %v253 = vadd.f32 %v75, %v252
  %v254 = vpop.f32.mrb[0].mxu0
  %v255 = vpop.f32.mrb[0].mxu0
  %v256 = vadd.f32 %v75, %v255
  %v257 = vpop.f32.mrb[0].mxu0
  %258 = vmatprep.mubr.bf16.mxu0 0
  %259 = vmatmul.mubr.bf16.gmra.mrb[0].mxu0 %v115
  %v260 = vpop.f32.mrb[0].mxu0
  %v261 = vadd.f32 %v75, %v260
  %v262 = vpop.f32.mrb[0].mxu0
  %v263 = vpop.f32.mrb[0].mxu0
  %v264 = vadd.f32 %v75, %v263
  %v265 = vpop.f32.mrb[0].mxu0
  %266 = vmatprep.mubr.bf16.mxu0 0
  %267 = vmatmul.mubr.bf16.gmra.mrb[0].mxu0 %v118
  %v268 = vpop.f32.mrb[0].mxu0
  %v269 = vadd.f32 %v75, %v268
  %v270 = vpop.f32.mrb[0].mxu0
  %v271 = vpop.f32.mrb[0].mxu0
  %v272 = vadd.f32 %v75, %v271
  %v273 = vpop.f32.mrb[0].mxu0
  %274 = vmatprep.mubr.bf16.mxu0 0
  %275 = vmatmul.mubr.bf16.gmra.mrb[0].mxu0 %v121
  %v276 = vpop.f32.mrb[0].mxu0
  %v277 = vadd.f32 %v75, %v276
  %v278 = vpop.f32.mrb[0].mxu0
  %v279 = vpop.f32.mrb[0].mxu0
  %v280 = vadd.f32 %v75, %v279
  %v281 = vpop.f32.mrb[0].mxu0
  %282 = vmatprep.mubr.bf16.mxu0 0
  %283 = vmatmul.mubr.bf16.gmra.mrb[0].mxu0 %v124
  %v284 = vpop.f32.mrb[0].mxu0
  %v285 = vadd.f32 %v75, %v284
  %v286 = vpop.f32.mrb[0].mxu0
  %v287 = vpop.f32.mrb[0].mxu0
  %v288 = vadd.f32 %v75, %v287
  %v289 = vpop.f32.mrb[0].mxu0
  %290 = vdwg.mxu0
  %v291 = vmax.f32 %v165, 0.0
  %v292 = vmax.f32 %v168, 0.0
  %v293 = vmax.f32 %v173, 0.0
  %v294 = vmax.f32 %v176, 0.0
  %v295 = vmax.f32 %v181, 0.0
  %v296 = vmax.f32 %v184, 0.0
  %v297 = vmax.f32 %v189, 0.0
  %v298 = vmax.f32 %v192, 0.0
  %v299 = vmax.f32 %v197, 0.0
  %v300 = vmax.f32 %v200, 0.0
  %v301 = vmax.f32 %v205, 0.0
  %v302 = vmax.f32 %v208, 0.0
  %v303 = vmax.f32 %v213, 0.0
  %v304 = vmax.f32 %v216, 0.0
  %v305 = vmax.f32 %v221, 0.0
  %v306 = vmax.f32 %v224, 0.0
  %v307 = vmax.f32 %v229, 0.0
  %v308 = vmax.f32 %v232, 0.0
  %v309 = vmax.f32 %v237, 0.0
  %v310 = vmax.f32 %v240, 0.0
  %v311 = vmax.f32 %v245, 0.0
  %v312 = vmax.f32 %v248, 0.0
  %v313 = vmax.f32 %v253, 0.0
  %v314 = vmax.f32 %v256, 0.0
  %v315 = vmax.f32 %v261, 0.0
  %v316 = vmax.f32 %v264, 0.0
  %v317 = vmax.f32 %v269, 0.0
  %v318 = vmax.f32 %v272, 0.0
  %v319 = vmax.f32 %v277, 0.0
  %v320 = vmax.f32 %v280, 0.0
  %v321 = vmax.f32 %v285, 0.0
  %v322 = vmax.f32 %v288, 0.0
  %v323 = vpack.c.bf16 %v292, %v291
  %v324 = vpack.c.bf16 %v294, %v293
  %v325 = vpack.c.bf16 %v296, %v295
  %v326 = vpack.c.bf16 %v298, %v297
  %v327 = vpack.c.bf16 %v300, %v299
  %v328 = vpack.c.bf16 %v302, %v301
  %v329 = vpack.c.bf16 %v304, %v303
  %v330 = vpack.c.bf16 %v306, %v305
  %v331 = vpack.c.bf16 %v308, %v307
  %v332 = vpack.c.bf16 %v310, %v309
  %v333 = vpack.c.bf16 %v312, %v311
  %v334 = vpack.c.bf16 %v314, %v313
  %v335 = vpack.c.bf16 %v316, %v315
  %v336 = vpack.c.bf16 %v318, %v317
  %v337 = vpack.c.bf16 %v320, %v319
  %v338 = vpack.c.bf16 %v322, %v321
  %v339 = vld [vmem:[%s3] sm:$0xf]
  %v340 = vld [vmem:[%s3 + $0x4] sm:$0xf]
  %v341 = vld [vmem:[%s3 + $0x8] sm:$0xf]
  %v342 = vld [vmem:[%s3 + $0xc] sm:$0xf]
  %v343 = vld [vmem:[%s4] sm:$0x1]
  %v345 = vlaneseq
  %v346 = vshrl.u32 %v345, 7
  %v347 = vsub.s32 0, %v346
  %v348 = vrot.slane %v343, %v347
  %v354 = vunpack.c.l.b16 %v339
  %v355 = vunpack.c.l.b16 %v340
  %v356 = vunpack.c.l.b16 %v341
  %v357 = vunpack.c.l.b16 %v342
  %v358 = vpack.c.b16 %v355, %v354
  %v359 = vpack.c.b16 %v357, %v356
  %vm362 = vcmask 261120
  %v364 = vsel %vm362, %v323, 0
  %v367 = vsel %vm362, %v324, 0
  %v370 = vsel %vm362, %v325, 0
  %v373 = vsel %vm362, %v326, 0
  %v376 = vsel %vm362, %v327, 0
  %v379 = vsel %vm362, %v328, 0
  %v382 = vsel %vm362, %v329, 0
  %v385 = vsel %vm362, %v330, 0
  %v388 = vsel %vm362, %v331, 0
  %v391 = vsel %vm362, %v332, 0
  %v394 = vsel %vm362, %v333, 0
  %v397 = vsel %vm362, %v334, 0
  %v400 = vsel %vm362, %v335, 0
  %v403 = vsel %vm362, %v336, 0
  %v406 = vsel %vm362, %v337, 0
  %v409 = vsel %vm362, %v338, 0
  %411 = vmatprep.subr.bf16.mxu0 0
  %412 = vmatpush1.bf16.msra.mxu0 %v358
  %413 = vmatprep.subr.bf16.mxu0 0
  %414 = vmatpush1.bf16.msra.mxu0 %v359
  %415 = vmatprep.subr.bf16.mxu0 0
  %416 = vmatpush1.bf16.msra.mxu0 0
  %417 = vmatprep.subr.bf16.mxu0 0
  %418 = vmatpush1.bf16.msra.mxu0 0
  %419 = vmatprep.subr.bf16.mxu0 0
  %420 = vmatpush1.bf16.msra.mxu0 0
  %421 = vmatprep.subr.bf16.mxu0 0
  %422 = vmatpush1.bf16.msra.mxu0 0
  %423 = vmatprep.subr.bf16.mxu0 0
  %424 = vmatpush1.bf16.msra.mxu0 0
  %425 = vmatprep.subr.bf16.mxu0 0
  %426 = vmatpush1.bf16.msra.mxu0 0
  %427 = vmatprep.subr.bf16.mxu0 0
  %428 = vmatpush1.bf16.msra.mxu0 0
  %429 = vmatprep.subr.bf16.mxu0 0
  %430 = vmatpush1.bf16.msra.mxu0 0
  %431 = vmatprep.subr.bf16.mxu0 0
  %432 = vmatpush1.bf16.msra.mxu0 0
  %433 = vmatprep.subr.bf16.mxu0 0
  %434 = vmatpush1.bf16.msra.mxu0 0
  %435 = vmatprep.subr.bf16.mxu0 0
  %436 = vmatpush1.bf16.msra.mxu0 0
  %437 = vmatprep.subr.bf16.mxu0 0
  %438 = vmatpush1.bf16.msra.mxu0 0
  %439 = vmatprep.subr.bf16.mxu0 0
  %440 = vmatpush1.bf16.msra.mxu0 0
  %441 = vmatprep.subr.bf16.mxu0 0
  %442 = vmatpush1.bf16.msra.mxu0 0
  %443 = vmatprep.mubr.bf16.mxu0 0
  %444 = vmatmul.mubr.bf16.gmra.mrb[0].mxu0 %v364
  %v445 = vpop.f32.mrb[0].mxu0
  %v446 = vadd.f32 %v348, %v445
  %v447 = vpop.f32.mrb[0].mxu0
  %v448 = vpop.f32.mrb[0].mxu0
  %v449 = vadd.f32 %v348, %v448
  %v450 = vpop.f32.mrb[0].mxu0
  %451 = vmatprep.mubr.bf16.mxu0 0
  %452 = vmatmul.mubr.bf16.gmra.mrb[0].mxu0 %v367
  %v453 = vpop.f32.mrb[0].mxu0
  %v454 = vadd.f32 %v348, %v453
  %v455 = vpop.f32.mrb[0].mxu0
  %v456 = vpop.f32.mrb[0].mxu0
  %v457 = vadd.f32 %v348, %v456
  %v458 = vpop.f32.mrb[0].mxu0
  %459 = vmatprep.mubr.bf16.mxu0 0
  %460 = vmatmul.mubr.bf16.gmra.mrb[0].mxu0 %v370
  %v461 = vpop.f32.mrb[0].mxu0
  %v462 = vadd.f32 %v348, %v461
  %v463 = vpop.f32.mrb[0].mxu0
  %v464 = vpop.f32.mrb[0].mxu0
  %v465 = vadd.f32 %v348, %v464
  %v466 = vpop.f32.mrb[0].mxu0
  %467 = vmatprep.mubr.bf16.mxu0 0
  %468 = vmatmul.mubr.bf16.gmra.mrb[0].mxu0 %v373
  %v469 = vpop.f32.mrb[0].mxu0
  %v470 = vadd.f32 %v348, %v469
  %v471 = vpop.f32.mrb[0].mxu0
  %v472 = vpop.f32.mrb[0].mxu0
  %v473 = vadd.f32 %v348, %v472
  %v474 = vpop.f32.mrb[0].mxu0
  %475 = vmatprep.mubr.bf16.mxu0 0
  %476 = vmatmul.mubr.bf16.gmra.mrb[0].mxu0 %v376
  %v477 = vpop.f32.mrb[0].mxu0
  %v478 = vadd.f32 %v348, %v477
  %v479 = vpop.f32.mrb[0].mxu0
  %v480 = vpop.f32.mrb[0].mxu0
  %v481 = vadd.f32 %v348, %v480
  %v482 = vpop.f32.mrb[0].mxu0
  %483 = vmatprep.mubr.bf16.mxu0 0
  %484 = vmatmul.mubr.bf16.gmra.mrb[0].mxu0 %v379
  %v485 = vpop.f32.mrb[0].mxu0
  %v486 = vadd.f32 %v348, %v485
  %v487 = vpop.f32.mrb[0].mxu0
  %v488 = vpop.f32.mrb[0].mxu0
  %v489 = vadd.f32 %v348, %v488
  %v490 = vpop.f32.mrb[0].mxu0
  %491 = vmatprep.mubr.bf16.mxu0 0
  %492 = vmatmul.mubr.bf16.gmra.mrb[0].mxu0 %v382
  %v493 = vpop.f32.mrb[0].mxu0
  %v494 = vadd.f32 %v348, %v493
  %v495 = vpop.f32.mrb[0].mxu0
  %v496 = vpop.f32.mrb[0].mxu0
  %v497 = vadd.f32 %v348, %v496
  %v498 = vpop.f32.mrb[0].mxu0
  %499 = vmatprep.mubr.bf16.mxu0 0
  %500 = vmatmul.mubr.bf16.gmra.mrb[0].mxu0 %v385
  %v501 = vpop.f32.mrb[0].mxu0
  %v502 = vadd.f32 %v348, %v501
  %v503 = vpop.f32.mrb[0].mxu0
  %v504 = vpop.f32.mrb[0].mxu0
  %v505 = vadd.f32 %v348, %v504
  %v506 = vpop.f32.mrb[0].mxu0
  %507 = vmatprep.mubr.bf16.mxu0 0
  %508 = vmatmul.mubr.bf16.gmra.mrb[0].mxu0 %v388
  %v509 = vpop.f32.mrb[0].mxu0
  %v510 = vadd.f32 %v348, %v509
  %v511 = vpop.f32.mrb[0].mxu0
  %v512 = vpop.f32.mrb[0].mxu0
  %v513 = vadd.f32 %v348, %v512
  %v514 = vpop.f32.mrb[0].mxu0
  %515 = vmatprep.mubr.bf16.mxu0 0
  %516 = vmatmul.mubr.bf16.gmra.mrb[0].mxu0 %v391
  %v517 = vpop.f32.mrb[0].mxu0
  %v518 = vadd.f32 %v348, %v517
  %v519 = vpop.f32.mrb[0].mxu0
  %v520 = vpop.f32.mrb[0].mxu0
  %v521 = vadd.f32 %v348, %v520
  %v522 = vpop.f32.mrb[0].mxu0
  %523 = vmatprep.mubr.bf16.mxu0 0
  %524 = vmatmul.mubr.bf16.gmra.mrb[0].mxu0 %v394
  %v525 = vpop.f32.mrb[0].mxu0
  %v526 = vadd.f32 %v348, %v525
  %v527 = vpop.f32.mrb[0].mxu0
  %v528 = vpop.f32.mrb[0].mxu0
  %v529 = vadd.f32 %v348, %v528
  %v530 = vpop.f32.mrb[0].mxu0
  %531 = vmatprep.mubr.bf16.mxu0 0
  %532 = vmatmul.mubr.bf16.gmra.mrb[0].mxu0 %v397
  %v533 = vpop.f32.mrb[0].mxu0
  %v534 = vadd.f32 %v348, %v533
  %v535 = vpop.f32.mrb[0].mxu0
  %v536 = vpop.f32.mrb[0].mxu0
  %v537 = vadd.f32 %v348, %v536
  %v538 = vpop.f32.mrb[0].mxu0
  %539 = vmatprep.mubr.bf16.mxu0 0
  %540 = vmatmul.mubr.bf16.gmra.mrb[0].mxu0 %v400
  %v541 = vpop.f32.mrb[0].mxu0
  %v542 = vadd.f32 %v348, %v541
  %v543 = vpop.f32.mrb[0].mxu0
  %v544 = vpop.f32.mrb[0].mxu0
  %v545 = vadd.f32 %v348, %v544
  %v546 = vpop.f32.mrb[0].mxu0
  %547 = vmatprep.mubr.bf16.mxu0 0
  %548 = vmatmul.mubr.bf16.gmra.mrb[0].mxu0 %v403
  %v549 = vpop.f32.mrb[0].mxu0
  %v550 = vadd.f32 %v348, %v549
  %v551 = vpop.f32.mrb[0].mxu0
  %v552 = vpop.f32.mrb[0].mxu0
  %v553 = vadd.f32 %v348, %v552
  %v554 = vpop.f32.mrb[0].mxu0
  %555 = vmatprep.mubr.bf16.mxu0 0
  %556 = vmatmul.mubr.bf16.gmra.mrb[0].mxu0 %v406
  %v557 = vpop.f32.mrb[0].mxu0
  %v558 = vadd.f32 %v348, %v557
  %v559 = vpop.f32.mrb[0].mxu0
  %v560 = vpop.f32.mrb[0].mxu0
  %v561 = vadd.f32 %v348, %v560
  %v562 = vpop.f32.mrb[0].mxu0
  %563 = vmatprep.mubr.bf16.mxu0 0
  %564 = vmatmul.mubr.bf16.gmra.mrb[0].mxu0 %v409
  %v565 = vpop.f32.mrb[0].mxu0
  %v566 = vadd.f32 %v348, %v565
  %v567 = vpop.f32.mrb[0].mxu0
  %v568 = vpop.f32.mrb[0].mxu0
  %v569 = vadd.f32 %v348, %v568
  %v570 = vpop.f32.mrb[0].mxu0
  %571 = vdwg.mxu0
  %vm572 = vcmask 64512
  %573 = vst.msk [vmem:[%s5] sm:$0xff] %vm572, %v446
  %574 = vst.msk [vmem:[%s5 + $0x8] sm:$0xff] %vm572, %v449
  %575 = vst.msk [vmem:[%s5 + $0x10] sm:$0xff] %vm572, %v454
  %576 = vst.msk [vmem:[%s5 + $0x18] sm:$0xff] %vm572, %v457
  %577 = vst.msk [vmem:[%s5 + $0x20] sm:$0xff] %vm572, %v462
  %578 = vst.msk [vmem:[%s5 + $0x28] sm:$0xff] %vm572, %v465
  %579 = vst.msk [vmem:[%s5 + $0x30] sm:$0xff] %vm572, %v470
  %580 = vst.msk [vmem:[%s5 + $0x38] sm:$0xff] %vm572, %v473
  %581 = vst.msk [vmem:[%s5 + $0x40] sm:$0xff] %vm572, %v478
  %582 = vst.msk [vmem:[%s5 + $0x48] sm:$0xff] %vm572, %v481
  %583 = vst.msk [vmem:[%s5 + $0x50] sm:$0xff] %vm572, %v486
  %584 = vst.msk [vmem:[%s5 + $0x58] sm:$0xff] %vm572, %v489
  %585 = vst.msk [vmem:[%s5 + $0x60] sm:$0xff] %vm572, %v494
  %586 = vst.msk [vmem:[%s5 + $0x68] sm:$0xff] %vm572, %v497
  %587 = vst.msk [vmem:[%s5 + $0x70] sm:$0xff] %vm572, %v502
  %588 = vst.msk [vmem:[%s5 + $0x78] sm:$0xff] %vm572, %v505
  %589 = vst.msk [vmem:[%s5 + $0x80] sm:$0xff] %vm572, %v510
  %590 = vst.msk [vmem:[%s5 + $0x88] sm:$0xff] %vm572, %v513
  %591 = vst.msk [vmem:[%s5 + $0x90] sm:$0xff] %vm572, %v518
  %592 = vst.msk [vmem:[%s5 + $0x98] sm:$0xff] %vm572, %v521
  %593 = vst.msk [vmem:[%s5 + $0xa0] sm:$0xff] %vm572, %v526
  %594 = vst.msk [vmem:[%s5 + $0xa8] sm:$0xff] %vm572, %v529
  %595 = vst.msk [vmem:[%s5 + $0xb0] sm:$0xff] %vm572, %v534
  %596 = vst.msk [vmem:[%s5 + $0xb8] sm:$0xff] %vm572, %v537
  %597 = vst.msk [vmem:[%s5 + $0xc0] sm:$0xff] %vm572, %v542
  %598 = vst.msk [vmem:[%s5 + $0xc8] sm:$0xff] %vm572, %v545
  %599 = vst.msk [vmem:[%s5 + $0xd0] sm:$0xff] %vm572, %v550
  %600 = vst.msk [vmem:[%s5 + $0xd8] sm:$0xff] %vm572, %v553
  %601 = vst.msk [vmem:[%s5 + $0xe0] sm:$0xff] %vm572, %v558
  %602 = vst.msk [vmem:[%s5 + $0xe8] sm:$0xff] %vm572, %v561
  %603 = vst.msk [vmem:[%s5 + $0xf0] sm:$0xff] %vm572, %v566
  %604 = vst.msk [vmem:[%s5 + $0xf8] sm:$0xff] %vm572, %v569
  // Predicated region
  $region22: #{backbone_seg_logits.1} parent=0 // pred_check
    _
  $region23: #{backbone_seg_logits.1} parent=0 // pred_check_branch
    %606 = sbr.rel (0) target = $region25
  $region24: #{backbone_seg_logits.1} parent=0 // pred_region
    _
  $region25: #{backbone_seg_logits.1} parent=0 // pred_fallthru
    _
  // Predicated region
  $region26: #{backbone_seg_logits.1} parent=0 // pred_check
    _
  $region27: #{backbone_seg_logits.1} parent=0 // pred_check_branch
    %608 = sbr.rel (0) target = $region29
  $region28: #{backbone_seg_logits.1} parent=0 // pred_region
    _
  $region29: #{backbone_seg_logits.1} parent=0 // pred_fallthru
    _

</llo_original>
